<compile_context>
chip_gen: v7x
topology: tpu7x:2x2x1
jax: 0.10.0
libtpu: 0.0.40
codegen_flags: <defaults>
</compile_context>

<pallas_src>
import jax
import jax.numpy as jnp
from jax.experimental import pallas as pl
from jax.experimental.pallas import tpu as pltpu


# ----------------------------------------------------------------------------
# Kernel 1: fused encoder projection + masked mean pooling.
#   grid = (num_rows, seq_tiles); one batch row per outer step, seq tiles inner.
#   per step: h = tanh(x_tile @ W + b) on the MXU, masked seq-sum via a
#   (1,TS)@(TS,H) matmul on the MXU into a VMEM accumulator; at the last seq
#   tile the accumulator is divided by the mask length and written out.
#   Hidden states stay in VMEM only.
# ----------------------------------------------------------------------------
def encode_pool_kernel(x_ref, m_ref, w_ref, b_ref, pooled_ref, acc_ref, cnt_ref):
    si = pl.program_id(1)

    @pl.when(si == 0)
    def _init():
        acc_ref[...] = jnp.zeros_like(acc_ref)
        cnt_ref[...] = jnp.zeros_like(cnt_ref)

    x = x_ref[0]                 # (TS, E) f32
    m = m_ref[0]                 # (1, TS) f32 (0/1 mask)
    h = jnp.tanh(
        jnp.dot(x, w_ref[...], preferred_element_type=jnp.float32) + b_ref[...]
    )                            # (TS, H)
    # Masked seq-reduction on the MXU (mask is 0/1, so this equals zeroing
    # masked rows and summing over the sequence).
    acc_ref[...] += jnp.dot(m, h, preferred_element_type=jnp.float32)   # (1, H)
    cnt_ref[...] += jnp.sum(m, axis=-1, keepdims=True)                  # (1, 1)

    @pl.when(si == pl.num_programs(1) - 1)
    def _finalize():
        pooled_ref[0] = acc_ref[...] * pl.reciprocal(cnt_ref[...], approx=False)


def encode_and_pool(x, mask, w, b, *, seq_tile=128):
    """x: (N, S, E) f32 embeddings, mask: (N, S) f32 -> pooled (N, H) f32."""
    N, S, E = x.shape
    H = w.shape[1]
    ts = min(seq_tile, S)
    assert S % ts == 0, "sequence length must be a multiple of the seq tile"
    mask3 = mask.reshape(N, 1, S)
    pooled = pl.pallas_call(
        encode_pool_kernel,
        out_shape=jax.ShapeDtypeStruct((N, 1, H), jnp.float32),
        grid=(N, S // ts),
        in_specs=[
            pl.BlockSpec((1, ts, E), lambda bi, si: (bi, si, 0)),   # embeddings
            pl.BlockSpec((1, 1, ts), lambda bi, si: (bi, 0, si)),   # mask
            pl.BlockSpec((E, H), lambda bi, si: (0, 0)),            # weight (resident)
            pl.BlockSpec((1, H), lambda bi, si: (0, 0)),            # bias (resident)
        ],
        out_specs=pl.BlockSpec((1, 1, H), lambda bi, si: (bi, 0, 0)),
        scratch_shapes=[
            pltpu.VMEM((1, H), jnp.float32),   # pooled-sum accumulator
            pltpu.VMEM((1, 1), jnp.float32),   # mask-length accumulator
        ],
        compiler_params=pltpu.CompilerParams(
            dimension_semantics=("parallel", "arbitrary"),
            vmem_limit_bytes=32 * 1024 * 1024,
        ),
    )(x, mask3, w, b)
    return pooled[:, 0, :]


# ----------------------------------------------------------------------------
# Kernel 2: cosine similarity on the pooled (B, H) vectors (tiny epilogue).
# ----------------------------------------------------------------------------
def cosine_kernel(a_ref, b_ref, o_ref):
    a = a_ref[...]               # (B, H)
    b = b_ref[...]               # (B, H)
    eps = jnp.float32(1e-8)
    dot = jnp.sum(a * b, axis=-1, keepdims=True)
    na = jnp.sqrt(jnp.sum(a * a, axis=-1, keepdims=True))
    nb = jnp.sqrt(jnp.sum(b * b, axis=-1, keepdims=True))
    denom = jnp.maximum(na, eps) * jnp.maximum(nb, eps)
    o_ref[...] = dot * pl.reciprocal(denom, approx=False)


def cosine_similarity(a, b):
    B, H = a.shape
    out = pl.pallas_call(
        cosine_kernel,
        out_shape=jax.ShapeDtypeStruct((B, 1), jnp.float32),
        grid=(1,),
        in_specs=[
            pl.BlockSpec((B, H), lambda i: (0, 0)),
            pl.BlockSpec((B, H), lambda i: (0, 0)),
        ],
        out_specs=pl.BlockSpec((B, 1), lambda i: (0, 0)),
    )(a, b)
    return out[:, 0]             # (B,)


# ----------------------------------------------------------------------------
# Synthetic "AutoModel" replacement + full forward.
# TODO(synk): the real SimilarityEstimator uses a pretrained transformer
# encoder; here it is substituted by a deterministic 1-layer synthetic encoder.
# ----------------------------------------------------------------------------
class SyntheticEncoderParams:
    def __init__(self, vocab_size, embed_dim, hidden_size, key):
        k1, k2, k3 = jax.random.split(key, 3)
        self.embedding = jax.random.normal(k1, (vocab_size, embed_dim), jnp.float32) * 0.02
        self.w = jax.random.normal(k2, (embed_dim, hidden_size), jnp.float32) * 0.02
        self.b = jax.random.normal(k3, (1, hidden_size), jnp.float32) * 0.02


@jax.jit
def similarity_estimator_forward_impl(embedding, w, b,
                                      src_ids, src_mask, pred_ids, pred_mask):
    B, _ = src_ids.shape
    # Single fused encoder + pooling pass over src and pred (concatenated on batch).
    ids = jnp.concatenate([src_ids, pred_ids], axis=0)                      # (2B, S)
    mask = jnp.concatenate([src_mask, pred_mask], axis=0).astype(jnp.float32)
    emb = embedding[ids].astype(jnp.float32)                                # (2B, S, E) gather in plain JAX
    pooled = encode_and_pool(emb, mask, w, b)                               # (2B, H)
    src_pool, pred_pool = pooled[:B], pooled[B:]
    return cosine_similarity(src_pool, pred_pool)                           # (B,)


def similarity_estimator_forward(params, src_ids, src_mask, pred_ids, pred_mask):
    return similarity_estimator_forward_impl(
        params.embedding, params.w, params.b, src_ids, src_mask, pred_ids, pred_mask
    )


if __name__ == "__main__":
    key = jax.random.PRNGKey(0)
    # Lane-dense hidden/embed (128) per the perf review; small batch/seq.
    B, S, E, H, V = 8, 256, 128, 128, 1000

    kp, k1, k2, k3, k4 = jax.random.split(key, 5)
    params = SyntheticEncoderParams(vocab_size=V, embed_dim=E, hidden_size=H, key=kp)

    src_ids = jax.random.randint(k1, (B, S), 0, V, dtype=jnp.int32)
    pred_ids = jax.random.randint(k2, (B, S), 0, V, dtype=jnp.int32)

    # Attention masks: a prefix of ones per row (lengths >= 1).
    src_lens = jax.random.randint(k3, (B,), 1, S + 1, dtype=jnp.int32)
    pred_lens = jax.random.randint(k4, (B,), 1, S + 1, dtype=jnp.int32)
    pos = jnp.arange(S)[None, :]
    src_mask = (pos < src_lens[:, None]).astype(jnp.int32)
    pred_mask = (pos < pred_lens[:, None]).astype(jnp.int32)

    sim = similarity_estimator_forward(params, src_ids, src_mask, pred_ids, pred_mask)
    sim = jax.block_until_ready(sim)

    # Pure-JAX reference of the same forward pass.
    def ref(p, s_ids, s_mask, p_ids, p_mask):
        def enc(ids):
            emb = p.embedding[ids].astype(jnp.float32)
            return jnp.tanh(
                jnp.einsum("bse,eh->bsh", emb, p.w,
                           precision=jax.lax.Precision.HIGHEST) + p.b[0])
        def pool(states, mask):
            m = mask.astype(jnp.float32)
            s = jnp.sum(states * m[:, :, None], axis=1)
            return s / jnp.sum(m, axis=1, keepdims=True)
        sp = pool(enc(s_ids), s_mask)
        pp = pool(enc(p_ids), p_mask)
        eps = 1e-8
        num = jnp.sum(sp * pp, -1)
        den = jnp.maximum(jnp.linalg.norm(sp, axis=-1), eps) * \
              jnp.maximum(jnp.linalg.norm(pp, axis=-1), eps)
        return num / den

    expected = ref(params, src_ids, src_mask, pred_ids, pred_mask)
    assert sim.shape == (B,)
    # Tolerance covers f32-MXU-pass vs VPU-sum ordering differences.
    assert jnp.allclose(sim, expected, atol=2e-3, rtol=2e-3), (sim, expected)
    print("KERNEL_OK")
</pallas_src>

<mosaic_0001>
module attributes {stable_mosaic.version = 11 : i64} {
  func.func @encode_pool_kernel(%arg0: i32, %arg1: i32, %arg2: memref<1x128x128xf32, #tpu.memory_space<vmem>>, %arg3: memref<1x1x128xf32, #tpu.memory_space<vmem>>, %arg4: memref<128x128xf32, #tpu.memory_space<vmem>>, %arg5: memref<1x128xf32, #tpu.memory_space<vmem>>, %arg6: memref<1x1x128xf32, #tpu.memory_space<vmem>>, %arg7: memref<1x128xf32, #tpu.memory_space<vmem>>, %arg8: memref<1x1xf32, #tpu.memory_space<vmem>>) attributes {dimension_semantics = [#tpu.dimension_semantics<parallel>, #tpu.dimension_semantics<arbitrary>], iteration_bounds = array<i64: 16, 2>, scalar_prefetch = 0 : i64, scratch_operands = 2 : i64, tpu.core_type = #tpu.core_type<tc>, window_params = [{transform_indices = @transform_0, window_bounds = array<i64: 1, 128, 128>}, {transform_indices = @transform_1, window_bounds = array<i64: 1, 1, 128>}, {pipeline_mode = #tpu.pipeline_mode<synchronous>, transform_indices = @transform_2, window_bounds = array<i64: 128, 128>}, {pipeline_mode = #tpu.pipeline_mode<synchronous>, transform_indices = @transform_3, window_bounds = array<i64: 1, 128>}, {transform_indices = @transform_4, window_bounds = array<i64: 1, 1, 128>}]} {
    %c0_i32 = arith.constant 0 : i32
    %0 = arith.cmpi eq, %arg1, %c0_i32 : i32
    %1 = arith.extui %0 : i1 to i32
    %c0_i32_0 = arith.constant 0 : i32
    %2 = arith.cmpi ne, %1, %c0_i32_0 : i32
    scf.if %2 {
      %cst_21 = arith.constant 0.000000e+00 : f32
      %25 = vector.broadcast %cst_21 : f32 to vector<1x128xf32>
      %c0_22 = arith.constant 0 : index
      %c0_23 = arith.constant 0 : index
      %26 = vector.load %arg7[%c0_22, %c0_23] : memref<1x128xf32, #tpu.memory_space<vmem>>, vector<1x128xf32>
      tpu.vector_store %arg7[%c0_22, %c0_23], %25 {strides = array<i32>} : memref<1x128xf32, #tpu.memory_space<vmem>>, vector<1x128xf32>,
      %cst_24 = arith.constant 0.000000e+00 : f32
      %27 = vector.broadcast %cst_24 : f32 to vector<1x1xf32>
      %c0_25 = arith.constant 0 : index
      %c0_26 = arith.constant 0 : index
      %28 = vector.load %arg8[%c0_25, %c0_26] : memref<1x1xf32, #tpu.memory_space<vmem>>, vector<1x1xf32>
      tpu.vector_store %arg8[%c0_25, %c0_26], %27 {strides = array<i32>} : memref<1x1xf32, #tpu.memory_space<vmem>>, vector<1x1xf32>,
    } else {
    }
    %c0 = arith.constant 0 : index
    %c0_1 = arith.constant 0 : index
    %c0_2 = arith.constant 0 : index
    %3 = vector.load %arg2[%c0, %c0_1, %c0_2] : memref<1x128x128xf32, #tpu.memory_space<vmem>>, vector<1x128x128xf32>
    %4 = vector.shape_cast %3 : vector<1x128x128xf32> to vector<128x128xf32>
    %c0_3 = arith.constant 0 : index
    %c0_4 = arith.constant 0 : index
    %c0_5 = arith.constant 0 : index
    %5 = vector.load %arg3[%c0_3, %c0_4, %c0_5] : memref<1x1x128xf32, #tpu.memory_space<vmem>>, vector<1x1x128xf32>
    %6 = vector.shape_cast %5 : vector<1x1x128xf32> to vector<1x128xf32>
    %c0_6 = arith.constant 0 : index
    %c0_7 = arith.constant 0 : index
    %7 = vector.load %arg4[%c0_6, %c0_7] : memref<128x128xf32, #tpu.memory_space<vmem>>, vector<128x128xf32>
    %cst = arith.constant dense<0.000000e+00> : vector<128x128xf32>
    %8 = tpu.matmul %4, %7, %cst {dimension_numbers = #tpu.dot_dimension_numbers<[1], [0], [0], [1], [0, 0, 1, 1], [], []>} : vector<128x128xf32>, vector<128x128xf32>, vector<128x128xf32> -> vector<128x128xf32>
    %c0_8 = arith.constant 0 : index
    %c0_9 = arith.constant 0 : index
    %9 = vector.load %arg5[%c0_8, %c0_9] : memref<1x128xf32, #tpu.memory_space<vmem>>, vector<1x128xf32>
    %10 = vector.broadcast %9 : vector<1x128xf32> to vector<128x128xf32>
    %11 = arith.addf %8, %10 : vector<128x128xf32>
    %12 = math.tanh %11 : vector<128x128xf32>
    %c0_10 = arith.constant 0 : index
    %c0_11 = arith.constant 0 : index
    %13 = vector.load %arg7[%c0_10, %c0_11] : memref<1x128xf32, #tpu.memory_space<vmem>>, vector<1x128xf32>
    %cst_12 = arith.constant dense<0.000000e+00> : vector<1x128xf32>
    %14 = tpu.matmul %6, %12, %cst_12 {dimension_numbers = #tpu.dot_dimension_numbers<[1], [0], [0], [1], [0, 0, 1, 1], [], []>} : vector<1x128xf32>, vector<128x128xf32>, vector<1x128xf32> -> vector<1x128xf32>
    %15 = arith.addf %13, %14 : vector<1x128xf32>
    %c0_13 = arith.constant 0 : index
    %c0_14 = arith.constant 0 : index
    %16 = vector.load %arg7[%c0_13, %c0_14] : memref<1x128xf32, #tpu.memory_space<vmem>>, vector<1x128xf32>
    tpu.vector_store %arg7[%c0_13, %c0_14], %15 {strides = array<i32>} : memref<1x128xf32, #tpu.memory_space<vmem>>, vector<1x128xf32>,
    %c0_15 = arith.constant 0 : index
    %c0_16 = arith.constant 0 : index
    %17 = vector.load %arg8[%c0_15, %c0_16] : memref<1x1xf32, #tpu.memory_space<vmem>>, vector<1x1xf32>
    %cst_17 = arith.constant dense<0.000000e+00> : vector<1xf32>
    %18 = vector.multi_reduction <add>, %6, %cst_17 [1] : vector<1x128xf32> to vector<1xf32>
    %19 = vector.shape_cast %18 : vector<1xf32> to vector<1x1xf32>
    %20 = arith.addf %17, %19 : vector<1x1xf32>
    %c0_18 = arith.constant 0 : index
    %c0_19 = arith.constant 0 : index
    %21 = vector.load %arg8[%c0_18, %c0_19] : memref<1x1xf32, #tpu.memory_space<vmem>>, vector<1x1xf32>
    tpu.vector_store %arg8[%c0_18, %c0_19], %20 {strides = array<i32>} : memref<1x1xf32, #tpu.memory_space<vmem>>, vector<1x1xf32>,
    %c1_i32 = arith.constant 1 : i32
    %22 = arith.cmpi eq, %arg1, %c1_i32 : i32
    %23 = arith.extui %22 : i1 to i32
    %c0_i32_20 = arith.constant 0 : i32
    %24 = arith.cmpi ne, %23, %c0_i32_20 : i32
    scf.if %24 {
      %c0_21 = arith.constant 0 : index
      %c0_22 = arith.constant 0 : index
      %25 = vector.load %arg7[%c0_21, %c0_22] : memref<1x128xf32, #tpu.memory_space<vmem>>, vector<1x128xf32>
      %c0_23 = arith.constant 0 : index
      %c0_24 = arith.constant 0 : index
      %26 = vector.load %arg8[%c0_23, %c0_24] : memref<1x1xf32, #tpu.memory_space<vmem>>, vector<1x1xf32>
      %27 = tpu.reciprocal %26 : vector<1x1xf32> -> vector<1x1xf32>
      %28 = vector.broadcast %27 : vector<1x1xf32> to vector<1x128xf32>
      %29 = arith.mulf %25, %28 : vector<1x128xf32>
      %c0_25 = arith.constant 0 : index
      %c0_26 = arith.constant 0 : index
      %c0_27 = arith.constant 0 : index
      %30 = vector.load %arg6[%c0_25, %c0_26, %c0_27] : memref<1x1x128xf32, #tpu.memory_space<vmem>>, vector<1x1x128xf32>
      %31 = vector.shape_cast %30 : vector<1x1x128xf32> to vector<1x128xf32>
      %32 = vector.shape_cast %29 : vector<1x128xf32> to vector<1x1x128xf32>
      tpu.vector_store %arg6[%c0_25, %c0_26, %c0_27], %32 {strides = array<i32>} : memref<1x1x128xf32, #tpu.memory_space<vmem>>, vector<1x1x128xf32>,
    } else {
    }
    return
  }
  func.func @transform_0(%arg0: i32, %arg1: i32) -> (i32, i32, i32) {
    %c0_i32 = arith.constant 0 : i32
    %c0_i32_0 = arith.constant 0 : i32
    return %arg0, %arg1, %c0_i32 : i32, i32, i32
  }
  func.func @transform_1(%arg0: i32, %arg1: i32) -> (i32, i32, i32) {
    %c0_i32 = arith.constant 0 : i32
    %c0_i32_0 = arith.constant 0 : i32
    return %arg0, %c0_i32, %arg1 : i32, i32, i32
  }
  func.func @transform_2(%arg0: i32, %arg1: i32) -> (i32, i32) {
    %c0_i32 = arith.constant 0 : i32
    %c0_i32_0 = arith.constant 0 : i32
    %c0_i32_1 = arith.constant 0 : i32
    return %c0_i32, %c0_i32_0 : i32, i32
  }
  func.func @transform_3(%arg0: i32, %arg1: i32) -> (i32, i32) {
    %c0_i32 = arith.constant 0 : i32
    %c0_i32_0 = arith.constant 0 : i32
    %c0_i32_1 = arith.constant 0 : i32
    return %c0_i32, %c0_i32_0 : i32, i32
  }
  func.func @transform_4(%arg0: i32, %arg1: i32) -> (i32, i32, i32) {
    %c0_i32 = arith.constant 0 : i32
    %c0_i32_0 = arith.constant 0 : i32
    %c0_i32_1 = arith.constant 0 : i32
    return %arg0, %c0_i32, %c0_i32_0 : i32, i32, i32
  }
}

module attributes {stable_mosaic.version = 11 : i64} {
  func.func @cosine_kernel(%arg0: i32, %arg1: memref<8x128xf32, #tpu.memory_space<vmem>>, %arg2: memref<8x128xf32, #tpu.memory_space<vmem>>, %arg3: memref<8x1xf32, #tpu.memory_space<vmem>>) attributes {dimension_semantics = [#tpu.dimension_semantics<arbitrary>], iteration_bounds = array<i64: 1>, scalar_prefetch = 0 : i64, scratch_operands = 0 : i64, tpu.core_type = #tpu.core_type<tc>, window_params = [{pipeline_mode = #tpu.pipeline_mode<synchronous>, transform_indices = @transform_0, window_bounds = array<i64: 8, 128>}, {pipeline_mode = #tpu.pipeline_mode<synchronous>, transform_indices = @transform_1, window_bounds = array<i64: 8, 128>}, {pipeline_mode = #tpu.pipeline_mode<synchronous>, transform_indices = @transform_2, window_bounds = array<i64: 8, 1>}]} {
    %c0 = arith.constant 0 : index
    %c0_0 = arith.constant 0 : index
    %0 = vector.load %arg1[%c0, %c0_0] : memref<8x128xf32, #tpu.memory_space<vmem>>, vector<8x128xf32>
    %c0_1 = arith.constant 0 : index
    %c0_2 = arith.constant 0 : index
    %1 = vector.load %arg2[%c0_1, %c0_2] : memref<8x128xf32, #tpu.memory_space<vmem>>, vector<8x128xf32>
    %2 = arith.mulf %0, %1 : vector<8x128xf32>
    %cst = arith.constant dense<0.000000e+00> : vector<8xf32>
    %3 = vector.multi_reduction <add>, %2, %cst [1] : vector<8x128xf32> to vector<8xf32>
    %4 = vector.shape_cast %3 : vector<8xf32> to vector<8x1xf32>
    %5 = arith.mulf %0, %0 : vector<8x128xf32>
    %cst_3 = arith.constant dense<0.000000e+00> : vector<8xf32>
    %6 = vector.multi_reduction <add>, %5, %cst_3 [1] : vector<8x128xf32> to vector<8xf32>
    %7 = vector.shape_cast %6 : vector<8xf32> to vector<8x1xf32>
    %8 = math.sqrt %7 : vector<8x1xf32>
    %9 = arith.mulf %1, %1 : vector<8x128xf32>
    %cst_4 = arith.constant dense<0.000000e+00> : vector<8xf32>
    %10 = vector.multi_reduction <add>, %9, %cst_4 [1] : vector<8x128xf32> to vector<8xf32>
    %11 = vector.shape_cast %10 : vector<8xf32> to vector<8x1xf32>
    %12 = math.sqrt %11 : vector<8x1xf32>
    %cst_5 = arith.constant 9.99999993E-9 : f32
    %13 = vector.broadcast %cst_5 : f32 to vector<8x1xf32>
    %14 = arith.maximumf %8, %13 : vector<8x1xf32>
    %cst_6 = arith.constant 9.99999993E-9 : f32
    %15 = vector.broadcast %cst_6 : f32 to vector<8x1xf32>
    %16 = arith.maximumf %12, %15 : vector<8x1xf32>
    %17 = arith.mulf %14, %16 : vector<8x1xf32>
    %18 = tpu.reciprocal %17 : vector<8x1xf32> -> vector<8x1xf32>
    %19 = arith.mulf %4, %18 : vector<8x1xf32>
    %c0_7 = arith.constant 0 : index
    %c0_8 = arith.constant 0 : index
    %20 = vector.load %arg3[%c0_7, %c0_8] : memref<8x1xf32, #tpu.memory_space<vmem>>, vector<8x1xf32>
    tpu.vector_store %arg3[%c0_7, %c0_8], %19 {strides = array<i32>} : memref<8x1xf32, #tpu.memory_space<vmem>>, vector<8x1xf32>,
    return
  }
  func.func @transform_0(%arg0: i32) -> (i32, i32) {
    %c0_i32 = arith.constant 0 : i32
    %c0_i32_0 = arith.constant 0 : i32
    %c0_i32_1 = arith.constant 0 : i32
    return %c0_i32, %c0_i32_0 : i32, i32
  }
  func.func @transform_1(%arg0: i32) -> (i32, i32) {
    %c0_i32 = arith.constant 0 : i32
    %c0_i32_0 = arith.constant 0 : i32
    %c0_i32_1 = arith.constant 0 : i32
    return %c0_i32, %c0_i32_0 : i32, i32
  }
  func.func @transform_2(%arg0: i32) -> (i32, i32) {
    %c0_i32 = arith.constant 0 : i32
    %c0_i32_0 = arith.constant 0 : i32
    %c0_i32_1 = arith.constant 0 : i32
    return %c0_i32, %c0_i32_0 : i32, i32
  }
}

</mosaic_0001>

<llo_original>
// kernel: similarity_estimator_forward_impl.3
$region0: #{similarity_estimator_forward_impl.3}
  #allocation0 [shape = 'u32[]', space=smem, size = 0x4, offset = 0x4, fixed_abs, tag = 'smem constant byte address 0x4 - core index']
  #allocation1 [shape = 'u32[144,128]{1,0:T(1,128)}', space=vmem, size = 0x12000, scoped, tag = 'internal scratch']
  %s0 = inlined_call_operand.vmem [shape: f32[8,128], index: 0, kind: input, shape index: {}]
  %s1 = inlined_call_operand.vmem [shape: f32[8,128], index: 1, kind: input, shape index: {}]
  %s2 = inlined_call_operand.vmem [shape: f32[8,1], index: 2, kind: output, shape index: {}]
  %s3 = sld [smem:[#allocation0]]
  $region18: #{similarity_estimator_forward_impl.3} parent=0
    _
  %s5 = ssub.s32 1, %s3
  %s6 = scalar_select 0, %s5, %s3
  // Predicated region
  $region2: #{similarity_estimator_forward_impl.3} parent=0 // pred_check
    _
  $region3: #{similarity_estimator_forward_impl.3} parent=0 // pred_check_branch
    %8 = sbr.rel (0) target = $region5
  $region4: #{similarity_estimator_forward_impl.3} parent=0 // pred_region
    _
  $region5: #{similarity_estimator_forward_impl.3} parent=0 // pred_fallthru
    _
  // Predicated region
  $region6: #{similarity_estimator_forward_impl.3} parent=0 // pred_check
    _
  $region7: #{similarity_estimator_forward_impl.3} parent=0 // pred_check_branch
    %10 = sbr.rel (0) target = $region9
  $region8: #{similarity_estimator_forward_impl.3} parent=0 // pred_region
    _
  $region9: #{similarity_estimator_forward_impl.3} parent=0 // pred_fallthru
    _
  %v11 = vld [vmem:[%s0] sm:$0xff]
  %v12 = vld [vmem:[%s1] sm:$0xff]
  %v13 = vmul.f32 %v11, %v12
  %14 = vadd.xlane.f32.xlu0 %v13
  %v15 = vpop.xlane.xlu0 %14
  %v16 = vmul.f32 %v11, %v11
  %17 = vadd.xlane.f32.xlu0 %v16
  %v18 = vpop.xlane.xlu0 %17
  %v19 = vrsqrt.pop %v18
  %v20 = vmul.f32 %v18, %v19
  %vm21 = vcmp.eq.f32.partialorder %v18, inf
  %v22 = vsel %vm21, %v18, %v20
  %vm23 = vcmp.eq.f32.partialorder %v18, 0.0
  %v24 = vand.u32 %v18, 2147483648
  %v25 = vsel %vm23, %v24, %v22
  %v26 = vmul.f32 %v12, %v12
  %27 = vadd.xlane.f32.xlu0 %v26
  %v28 = vpop.xlane.xlu0 %27
  %v29 = vrsqrt.pop %v28
  %v30 = vmul.f32 %v28, %v29
  %vm31 = vcmp.eq.f32.partialorder %v28, inf
  %v32 = vsel %vm31, %v28, %v30
  %vm33 = vcmp.eq.f32.partialorder %v28, 0.0
  %v34 = vand.u32 %v28, 2147483648
  %v35 = vsel %vm33, %v34, %v32
  %v36 = vmax.f32 %v25, 1e-08
  %v37 = vmax.f32 %v35, 1e-08
  %v38 = vmul.f32 %v36, %v37
  %v39 = vrcp.pop %v38
  %v40 = vmul.f32 %v15, %v39
  %vm41 = vcmask 7168
  %42 = vst.msk [vmem:[%s2] sm:$0xff] %vm41, %v40
  // Predicated region
  $region10: #{similarity_estimator_forward_impl.3} parent=0 // pred_check
    _
  $region11: #{similarity_estimator_forward_impl.3} parent=0 // pred_check_branch
    %44 = sbr.rel (0) target = $region13
  $region12: #{similarity_estimator_forward_impl.3} parent=0 // pred_region
    _
  $region13: #{similarity_estimator_forward_impl.3} parent=0 // pred_fallthru
    _
  // Predicated region
  $region14: #{similarity_estimator_forward_impl.3} parent=0 // pred_check
    _
  $region15: #{similarity_estimator_forward_impl.3} parent=0 // pred_check_branch
    %46 = sbr.rel (0) target = $region17
  $region16: #{similarity_estimator_forward_impl.3} parent=0 // pred_region
    _
  $region17: #{similarity_estimator_forward_impl.3} parent=0 // pred_fallthru
    _

// kernel: similarity_estimator_forward_impl.2
$region0: #{similarity_estimator_forward_impl.2}
  #allocation0 [shape = 'u32[]', space=smem, size = 0x4, offset = 0x4, fixed_abs, tag = 'smem constant byte address 0x4 - core index']
  #allocation1 [shape = 'u32[144,128]{1,0:T(1,128)}', space=vmem, size = 0x12000, scoped, tag = 'internal scratch']
  #allocation2 [shape = 'f32[1,128]{1,0:T(1,128)}', space=vmem, size = 0x200, scoped, tag = 'scratch operand']
  #allocation3 [shape = 'f32[1,1]{1,0:T(1,128)}', space=vmem, size = 0x200, scoped, tag = 'scratch operand']
  %s0 = inlined_call_operand.vmem [shape: f32[16,256,128], index: 0, kind: input, shape index: {}]
  %s1 = inlined_call_operand.vmem [shape: f32[16,1,256], index: 1, kind: input, shape index: {}]
  %s2 = inlined_call_operand.vmem [shape: f32[128,128], index: 2, kind: input, shape index: {}]
  %s3 = inlined_call_operand.vmem [shape: f32[1,128], index: 3, kind: input, shape index: {}]
  %s4 = inlined_call_operand.vmem [shape: f32[16,1,128], index: 4, kind: output, shape index: {}]
  %s5 = sld [smem:[#allocation0]]
  $region57: #{similarity_estimator_forward_impl.2} parent=0
    _
  %s7 = ssub.s32 1, %s5
  %s8 = scalar_select 0, %s7, %s5
  loop: start=0, step=1, limit=34
  $region2: #{similarity_estimator_forward_impl.2} parent=0 // loop_pre_header
    _
  $region3: #{similarity_estimator_forward_impl.2} parent=0 // loop_header
    %s10 = sphi 0, %s14
    %p11 = scmp.ge.s32.totalorder %s10, 34
    %s17 = sphi 0, %s29
    %s18 = sphi 0, %s25
    %s19 = sphi 0, %s17
    %s20 = sphi 0, %s18
    %s21 = sphi 0, %s19
    %s22 = sphi 0, %s20
    %s34 = sphi 0, %s36
    %s37 = sphi 0, %s34
    %s38 = sphi 0, %s37
    %s54 = sphi 0, %s38
    %s62 = sphi 0, %s64
    %s65 = sphi 0, %s62
    %s66 = sphi 0, %s65
    %s82 = sphi 0, %s66
    %s86 = sphi 0, %s86
    %s88 = sphi 0, %s86
    %s89 = sphi 0, %s88
    %s103 = sphi 0, %s89
    %s107 = sphi 0, %s107
    %s109 = sphi 0, %s107
    %s110 = sphi 0, %s109
    %s124 = sphi 0, %s110
    %s130 = sphi 0, %s132
    %s133 = sphi 0, %s130
    %s134 = sphi 0, %s133
    %s150 = sphi 0, %s134
  $region4: #{similarity_estimator_forward_impl.2} parent=0 // loop_header_branch
    %13 = sbr.rel (%p11) target = $region8
  $region5: #{similarity_estimator_forward_impl.2} parent=0 // loop_body
    %s15 = ssub.s32 %s10, 1
    %s16 = ssub.s32 %s10, 2
    %s23 = sadd.s32 1, %s18
    %p24 = scmp.ge.s32.totalorder %s23, 2
    %s25 = scalar_select %p24, 0, %s23
    %s26 = sadd.s32 1, %s17
    %s27 = scalar_select %p24, %s26, %s17
    %p28 = scmp.ge.s32.totalorder %s27, 16
    %s29 = scalar_select %p28, 0, %s27
    %s30 = ssub.s32 %s17, %s29
    %s31 = ssub.s32 %s18, %s25
    %s32 = sor.u32 %s30, %s31
    %p33 = scmp.eq.s32.totalorder %s32, 0
    %s35 = sadd.s32 %s34, 1
    %s36 = scalar_select %p33, %s34, %s35
    %p39 = pneg %p33
    %p40 = scmp.eq.s32.totalorder %s10, 31
    %p41 = por %p39, %p40
    %p42 = scmp.ne.s32.totalorder %s34, %s37
    %p43 = scmp.eq.s32.totalorder %s10, 0
    %p44 = por %p42, %p43
    %p45 = scmp.ne.s32.totalorder %s34, %s37
    %p46 = scmp.eq.s32.totalorder %s15, 31
    %p47 = por %p45, %p46
    %p48 = scmp.ne.s32.totalorder %s37, %s38
    %p49 = scmp.eq.s32.totalorder %s15, 0
    %p50 = por %p48, %p49
    %p51 = scmp.ne.s32.totalorder %s37, %s38
    %p52 = scmp.eq.s32.totalorder %s16, 31
    %p53 = por %p51, %p52
    %p55 = scmp.ne.s32.totalorder %s38, %s54
    %p56 = scmp.eq.s32.totalorder %s16, 0
    %p57 = por %p55, %p56
    %s58 = ssub.s32 %s17, %s29
    %s59 = ssub.s32 %s18, %s25
    %s60 = sor.u32 %s58, %s59
    %p61 = scmp.eq.s32.totalorder %s60, 0
    %s63 = sadd.s32 %s62, 1
    %s64 = scalar_select %p61, %s62, %s63
    %p67 = pneg %p61
    %p68 = scmp.eq.s32.totalorder %s10, 31
    %p69 = por %p67, %p68
    %p70 = scmp.ne.s32.totalorder %s62, %s65
    %p71 = scmp.eq.s32.totalorder %s10, 0
    %p72 = por %p70, %p71
    %p73 = scmp.ne.s32.totalorder %s62, %s65
    %p74 = scmp.eq.s32.totalorder %s15, 31
    %p75 = por %p73, %p74
    %p76 = scmp.ne.s32.totalorder %s65, %s66
    %p77 = scmp.eq.s32.totalorder %s15, 0
    %p78 = por %p76, %p77
    %p79 = scmp.ne.s32.totalorder %s65, %s66
    %p80 = scmp.eq.s32.totalorder %s16, 31
    %p81 = por %p79, %p80
    %p83 = scmp.ne.s32.totalorder %s66, %s82
    %p84 = scmp.eq.s32.totalorder %s16, 0
    %p85 = por %p83, %p84
    %s87 = sadd.s32 %s86, 1
    %p90 = scmp.eq.s32.totalorder %s10, 31
    %p91 = scmp.ne.s32.totalorder %s86, %s88
    %p92 = scmp.eq.s32.totalorder %s10, 0
    %p93 = por %p91, %p92
    %p94 = scmp.ne.s32.totalorder %s86, %s88
    %p95 = scmp.eq.s32.totalorder %s15, 31
    %p96 = por %p94, %p95
    %p97 = scmp.ne.s32.totalorder %s88, %s89
    %p98 = scmp.eq.s32.totalorder %s15, 0
    %p99 = por %p97, %p98
    %p100 = scmp.ne.s32.totalorder %s88, %s89
    %p101 = scmp.eq.s32.totalorder %s16, 31
    %p102 = por %p100, %p101
    %p104 = scmp.ne.s32.totalorder %s89, %s103
    %p105 = scmp.eq.s32.totalorder %s16, 0
    %p106 = por %p104, %p105
    %s108 = sadd.s32 %s107, 1
    %p111 = scmp.eq.s32.totalorder %s10, 31
    %p112 = scmp.ne.s32.totalorder %s107, %s109
    %p113 = scmp.eq.s32.totalorder %s10, 0
    %p114 = por %p112, %p113
    %p115 = scmp.ne.s32.totalorder %s107, %s109
    %p116 = scmp.eq.s32.totalorder %s15, 31
    %p117 = por %p115, %p116
    %p118 = scmp.ne.s32.totalorder %s109, %s110
    %p119 = scmp.eq.s32.totalorder %s15, 0
    %p120 = por %p118, %p119
    %p121 = scmp.ne.s32.totalorder %s109, %s110
    %p122 = scmp.eq.s32.totalorder %s16, 31
    %p123 = por %p121, %p122
    %p125 = scmp.ne.s32.totalorder %s110, %s124
    %p126 = scmp.eq.s32.totalorder %s16, 0
    %p127 = por %p125, %p126
    %s128 = ssub.s32 %s17, %s29
    %p129 = scmp.eq.s32.totalorder %s128, 0
    %s131 = sadd.s32 %s130, 1
    %s132 = scalar_select %p129, %s130, %s131
    %p135 = pneg %p129
    %p136 = scmp.eq.s32.totalorder %s10, 31
    %p137 = por %p135, %p136
    %p138 = scmp.ne.s32.totalorder %s130, %s133
    %p139 = scmp.eq.s32.totalorder %s10, 0
    %p140 = por %p138, %p139
    %p141 = scmp.ne.s32.totalorder %s130, %s133
    %p142 = scmp.eq.s32.totalorder %s15, 31
    %p143 = por %p141, %p142
    %p144 = scmp.ne.s32.totalorder %s133, %s134
    %p145 = scmp.eq.s32.totalorder %s15, 0
    %p146 = por %p144, %p145
    %p147 = scmp.ne.s32.totalorder %s133, %s134
    %p148 = scmp.eq.s32.totalorder %s16, 31
    %p149 = por %p147, %p148
    %p151 = scmp.ne.s32.totalorder %s134, %s150
    %p152 = scmp.eq.s32.totalorder %s16, 0
    %p153 = por %p151, %p152
    %p154 = scmp.le.s32.totalorder 1, %s10
    %p155 = scmp.lt.s32.totalorder %s10, 33
    %p156 = pnand %p154, %p155
    %p157 = pneg %p156
    // Predicated region
    $region9: #{similarity_estimator_forward_impl.2} parent=5 // pred_check
      _
    $region10: #{similarity_estimator_forward_impl.2} parent=5 // pred_check_branch
      %159 = sbr.rel (%p156) target = $region12
    $region11: #{similarity_estimator_forward_impl.2} parent=5 // pred_region
      %s160 = ssub.s32 %s10, 1
      // Predicated region
      $region13: #{similarity_estimator_forward_impl.2} parent=11 // pred_check
        %p161 = pneg %p99
      $region14: #{similarity_estimator_forward_impl.2} parent=11 // pred_check_branch
        %163 = sbr.rel (%p161) target = $region16
      $region15: #{similarity_estimator_forward_impl.2} parent=11 // pred_region
        _
      $region16: #{similarity_estimator_forward_impl.2} parent=11 // pred_fallthru
        _
      // Predicated region
      $region17: #{similarity_estimator_forward_impl.2} parent=11 // pred_check
        %p164 = pneg %p120
      $region18: #{similarity_estimator_forward_impl.2} parent=11 // pred_check_branch
        %166 = sbr.rel (%p164) target = $region20
      $region19: #{similarity_estimator_forward_impl.2} parent=11 // pred_region
        _
      $region20: #{similarity_estimator_forward_impl.2} parent=11 // pred_fallthru
        _
    $region12: #{similarity_estimator_forward_impl.2} parent=5 // pred_fallthru
      _
    %p167 = scmp.lt.s32.totalorder %s10, 32
    // Predicated region
    $region21: #{similarity_estimator_forward_impl.2} parent=5 // pred_check
      %p168 = pneg %p167
    $region22: #{similarity_estimator_forward_impl.2} parent=5 // pred_check_branch
      %170 = sbr.rel (%p168) target = $region24
    $region23: #{similarity_estimator_forward_impl.2} parent=5 // pred_region
      // Predicated region
      $region25: #{similarity_estimator_forward_impl.2} parent=23 // pred_check
        %p171 = pneg %p44
      $region26: #{similarity_estimator_forward_impl.2} parent=23 // pred_check_branch
        %173 = sbr.rel (%p171) target = $region28
      $region27: #{similarity_estimator_forward_impl.2} parent=23 // pred_region
        %s174 = smul.u32 16, %s18
        %p175 = scmp.lt.s32.totalorder %s17, 15
        %s176 = scalar_select %p175, %s17, 15
        %p177 = scmp.lt.s32.totalorder %s174, 31
        %s178 = scalar_select %p177, %s174, 31
        %s179 = smul.addr %s176, 32
        %s180 = sadd.s32 %s178, %s179
        %s181 = smul.addr %s180, 8
        %s182 = scalar_lea.vmem %s0, %s181
        %s183 = smul.u32 16, %s18
      $region28: #{similarity_estimator_forward_impl.2} parent=23 // pred_fallthru
        _
      // Predicated region
      $region29: #{similarity_estimator_forward_impl.2} parent=23 // pred_check
        %p184 = pneg %p72
      $region30: #{similarity_estimator_forward_impl.2} parent=23 // pred_check_branch
        %186 = sbr.rel (%p184) target = $region32
      $region31: #{similarity_estimator_forward_impl.2} parent=23 // pred_region
        %p187 = scmp.lt.s32.totalorder %s17, 15
        %s188 = scalar_select %p187, %s17, 15
        %p189 = scmp.lt.s32.totalorder %s18, 1
        %s190 = scalar_select %p189, %s18, 1
        %s191 = smul.addr %s188, 2
        %s192 = sadd.s32 %s190, %s191
        %s193 = scalar_lea.vmem %s1, %s192
      $region32: #{similarity_estimator_forward_impl.2} parent=23 // pred_fallthru
        _
    $region24: #{similarity_estimator_forward_impl.2} parent=5 // pred_fallthru
      _
    %p194 = scmp.le.s32.totalorder 1, %s10
    %p195 = scmp.lt.s32.totalorder %s10, 33
    %p196 = pnand %p194, %p195
    %p197 = pneg %p196
    // Predicated region
    $region33: #{similarity_estimator_forward_impl.2} parent=5 // pred_check
      _
    $region34: #{similarity_estimator_forward_impl.2} parent=5 // pred_check_branch
      %199 = sbr.rel (%p196) target = $region36
    $region35: #{similarity_estimator_forward_impl.2} parent=5 // pred_region
      %s200 = ssub.s32 %s10, 1
      %s201 = smul.u32 16, %s20
      %p202 = scmp.lt.s32.totalorder %s19, 15
      %s203 = scalar_select %p202, %s19, 15
      %p204 = scmp.lt.s32.totalorder %s201, 31
      %s205 = scalar_select %p204, %s201, 31
      %s206 = smul.addr %s203, 32
      %s207 = sadd.s32 %s205, %s206
      %s208 = smul.addr %s207, 8
      %s209 = scalar_lea.vmem %s0, %s208
      %p210 = pneg %p50
      %p211 = pneg %p47
      %p212 = scmp.lt.s32.totalorder %s19, 15
      %s213 = scalar_select %p212, %s19, 15
      %p214 = scmp.lt.s32.totalorder %s20, 1
      %s215 = scalar_select %p214, %s20, 1
      %s216 = smul.addr %s213, 2
      %s217 = sadd.s32 %s215, %s216
      %s218 = scalar_lea.vmem %s1, %s217
      %p219 = pneg %p78
      %p220 = pneg %p75
      %p221 = pneg %p99
      %p222 = pneg %p96
      %p223 = pneg %p120
      %p224 = pneg %p117
      %p225 = pneg %p146
      %p226 = pneg %p143
      %p227 = scmp.lt.s32.totalorder %s19, 15
      %s228 = scalar_select %p227, %s19, 15
      %s229 = scalar_lea.vmem %s4, %s228
      %s230 = smul.u32 16, %s20
      %p231 = scmp.lt.s32.totalorder %s19, 15
      %s232 = scalar_select %p231, %s19, 15
      %p233 = scmp.lt.s32.totalorder %s230, 31
      %s234 = scalar_select %p233, %s230, 31
      %s235 = smul.addr %s232, 32
      %s236 = sadd.s32 %s234, %s235
      %s237 = smul.addr %s236, 8
      %s238 = scalar_lea.vmem %s0, %s237
      %s239 = smul.u32 16, %s20
      %p240 = scmp.lt.s32.totalorder %s19, 15
      %s241 = scalar_select %p240, %s19, 15
      %p242 = scmp.lt.s32.totalorder %s20, 1
      %s243 = scalar_select %p242, %s20, 1
      %s244 = smul.addr %s241, 2
      %s245 = sadd.s32 %s243, %s244
      %s246 = scalar_lea.vmem %s1, %s245
      %p247 = scmp.lt.s32.totalorder %s19, 15
      %s248 = scalar_select %p247, %s19, 15
      %s249 = scalar_lea.vmem %s4, %s248
      %p250 = scmp.eq.s32.totalorder %s20, 0
      // Predicated region
      $region37: #{similarity_estimator_forward_impl.2} parent=35 // pred_check
        %p251 = pneg %p250
      $region38: #{similarity_estimator_forward_impl.2} parent=35 // pred_check_branch
        %253 = sbr.rel (%p251) target = $region40
      $region39: #{similarity_estimator_forward_impl.2} parent=35 // pred_region
        %254 = vst [vmem:[#allocation2] sm:$0x1] 0.0
        %vm255 = vcmask 0
        %256 = vst.msk [vmem:[#allocation3] sm:$0x1] %vm255, 0.0
      $region40: #{similarity_estimator_forward_impl.2} parent=35 // pred_fallthru
        _
      %v257 = vld [vmem:[%s238] sm:$0xff]
      %v258 = vld [vmem:[%s238 + $0x8] sm:$0xff]
      %v259 = vld [vmem:[%s238 + $0x10] sm:$0xff]
      %v260 = vld [vmem:[%s238 + $0x18] sm:$0xff]
      %v261 = vld [vmem:[%s238 + $0x20] sm:$0xff]
      %v262 = vld [vmem:[%s238 + $0x28] sm:$0xff]
      %v263 = vld [vmem:[%s238 + $0x30] sm:$0xff]
      %v264 = vld [vmem:[%s238 + $0x38] sm:$0xff]
      %v265 = vld [vmem:[%s238 + $0x40] sm:$0xff]
      %v266 = vld [vmem:[%s238 + $0x48] sm:$0xff]
      %v267 = vld [vmem:[%s238 + $0x50] sm:$0xff]
      %v268 = vld [vmem:[%s238 + $0x58] sm:$0xff]
      %v269 = vld [vmem:[%s238 + $0x60] sm:$0xff]
      %v270 = vld [vmem:[%s238 + $0x68] sm:$0xff]
      %v271 = vld [vmem:[%s238 + $0x70] sm:$0xff]
      %v272 = vld [vmem:[%s238 + $0x78] sm:$0xff]
      %v273 = vld [vmem:[%s246] sm:$0x1]
      %v274 = vld [vmem:[%s2] sm:$0xff]
      %v275 = vld [vmem:[%s2 + $0x8] sm:$0xff]
      %v276 = vld [vmem:[%s2 + $0x10] sm:$0xff]
      %v277 = vld [vmem:[%s2 + $0x18] sm:$0xff]
      %v278 = vld [vmem:[%s2 + $0x20] sm:$0xff]
      %v279 = vld [vmem:[%s2 + $0x28] sm:$0xff]
      %v280 = vld [vmem:[%s2 + $0x30] sm:$0xff]
      %v281 = vld [vmem:[%s2 + $0x38] sm:$0xff]
      %v282 = vld [vmem:[%s2 + $0x40] sm:$0xff]
      %v283 = vld [vmem:[%s2 + $0x48] sm:$0xff]
      %v284 = vld [vmem:[%s2 + $0x50] sm:$0xff]
      %v285 = vld [vmem:[%s2 + $0x58] sm:$0xff]
      %v286 = vld [vmem:[%s2 + $0x60] sm:$0xff]
      %v287 = vld [vmem:[%s2 + $0x68] sm:$0xff]
      %v288 = vld [vmem:[%s2 + $0x70] sm:$0xff]
      %v289 = vld [vmem:[%s2 + $0x78] sm:$0xff]
      %v290 = vld [vmem:[%s3] sm:$0x1]
      %v292 = vlaneseq
      %v293 = vshrl.u32 %v292, 7
      %v294 = vsub.s32 0, %v293
      %v295 = vrot.slane %v290, %v294
      %297 = vmatprep.subr.mxu0 0.0
      %298 = vmatpush1.msra.mxu0 %v274
      %299 = vmatprep.subr.mxu0 0.0
      %300 = vmatpush1.msra.mxu0 %v275
      %301 = vmatprep.subr.mxu0 0.0
      %302 = vmatpush1.msra.mxu0 %v276
      %303 = vmatprep.subr.mxu0 0.0
      %304 = vmatpush1.msra.mxu0 %v277
      %305 = vmatprep.subr.mxu0 0.0
      %306 = vmatpush1.msra.mxu0 %v278
      %307 = vmatprep.subr.mxu0 0.0
      %308 = vmatpush1.msra.mxu0 %v279
      %309 = vmatprep.subr.mxu0 0.0
      %310 = vmatpush1.msra.mxu0 %v280
      %311 = vmatprep.subr.mxu0 0.0
      %312 = vmatpush1.msra.mxu0 %v281
      %313 = vmatprep.subr.mxu0 0.0
      %314 = vmatpush1.msra.mxu0 %v282
      %315 = vmatprep.subr.mxu0 0.0
      %316 = vmatpush1.msra.mxu0 %v283
      %317 = vmatprep.subr.mxu0 0.0
      %318 = vmatpush1.msra.mxu0 %v284
      %319 = vmatprep.subr.mxu0 0.0
      %320 = vmatpush1.msra.mxu0 %v285
      %321 = vmatprep.subr.mxu0 0.0
      %322 = vmatpush1.msra.mxu0 %v286
      %323 = vmatprep.subr.mxu0 0.0
      %324 = vmatpush1.msra.mxu0 %v287
      %325 = vmatprep.subr.mxu0 0.0
      %326 = vmatpush1.msra.mxu0 %v288
      %327 = vmatprep.subr.mxu0 0.0
      %328 = vmatpush1.msra.mxu0 %v289
      %329 = vmatprep.subr.mxu0 0.0
      %330 = vmatpush1.msra.mxu0 0.0
      %331 = vmatprep.subr.mxu0 0.0
      %332 = vmatpush1.msra.mxu0 0.0
      %333 = vmatprep.subr.mxu0 0.0
      %334 = vmatpush1.msra.mxu0 0.0
      %335 = vmatprep.subr.mxu0 0.0
      %336 = vmatpush1.msra.mxu0 0.0
      %337 = vmatprep.subr.mxu0 0.0
      %338 = vmatpush1.msra.mxu0 0.0
      %339 = vmatprep.subr.mxu0 0.0
      %340 = vmatpush1.msra.mxu0 0.0
      %341 = vmatprep.subr.mxu0 0.0
      %342 = vmatpush1.msra.mxu0 0.0
      %343 = vmatprep.subr.mxu0 0.0
      %344 = vmatpush1.msra.mxu0 0.0
      %345 = vmatprep.subr.mxu0 0.0
      %346 = vmatpush1.msra.mxu0 0.0
      %347 = vmatprep.subr.mxu0 0.0
      %348 = vmatpush1.msra.mxu0 0.0
      %349 = vmatprep.subr.mxu0 0.0
      %350 = vmatpush1.msra.mxu0 0.0
      %351 = vmatprep.subr.mxu0 0.0
      %352 = vmatpush1.msra.mxu0 0.0
      %353 = vmatprep.subr.mxu0 0.0
      %354 = vmatpush1.msra.mxu0 0.0
      %355 = vmatprep.subr.mxu0 0.0
      %356 = vmatpush1.msra.mxu0 0.0
      %357 = vmatprep.subr.mxu0 0.0
      %358 = vmatpush1.msra.mxu0 0.0
      %359 = vmatprep.subr.mxu0 0.0
      %360 = vmatpush1.msra.mxu0 0.0
      %361 = vmatprep.mubr.f32.mxu0 0.0
      %362 = vmatmul.mubr.f32.gmra.mrb[0].mxu0 %v257
      %v363 = vpop.f32.mrb[0].mxu0
      %v364 = vadd.f32 %v295, %v363
      %v365 = vpop.f32.mrb[0].mxu0
      %366 = vmatprep.mubr.f32.mxu0 0.0
      %367 = vmatmul.mubr.f32.gmra.mrb[0].mxu0 %v258
      %v368 = vpop.f32.mrb[0].mxu0
      %v369 = vadd.f32 %v295, %v368
      %v370 = vpop.f32.mrb[0].mxu0
      %371 = vmatprep.mubr.f32.mxu0 0.0
      %372 = vmatmul.mubr.f32.gmra.mrb[0].mxu0 %v259
      %v373 = vpop.f32.mrb[0].mxu0
      %v374 = vadd.f32 %v295, %v373
      %v375 = vpop.f32.mrb[0].mxu0
      %376 = vmatprep.mubr.f32.mxu0 0.0
      %377 = vmatmul.mubr.f32.gmra.mrb[0].mxu0 %v260
      %v378 = vpop.f32.mrb[0].mxu0
      %v379 = vadd.f32 %v295, %v378
      %v380 = vpop.f32.mrb[0].mxu0
      %381 = vmatprep.mubr.f32.mxu0 0.0
      %382 = vmatmul.mubr.f32.gmra.mrb[0].mxu0 %v261
      %v383 = vpop.f32.mrb[0].mxu0
      %v384 = vadd.f32 %v295, %v383
      %v385 = vpop.f32.mrb[0].mxu0
      %386 = vmatprep.mubr.f32.mxu0 0.0
      %387 = vmatmul.mubr.f32.gmra.mrb[0].mxu0 %v262
      %v388 = vpop.f32.mrb[0].mxu0
      %v389 = vadd.f32 %v295, %v388
      %v390 = vpop.f32.mrb[0].mxu0
      %391 = vmatprep.mubr.f32.mxu0 0.0
      %392 = vmatmul.mubr.f32.gmra.mrb[0].mxu0 %v263
      %v393 = vpop.f32.mrb[0].mxu0
      %v394 = vadd.f32 %v295, %v393
      %v395 = vpop.f32.mrb[0].mxu0
      %396 = vmatprep.mubr.f32.mxu0 0.0
      %397 = vmatmul.mubr.f32.gmra.mrb[0].mxu0 %v264
      %v398 = vpop.f32.mrb[0].mxu0
      %v399 = vadd.f32 %v295, %v398
      %v400 = vpop.f32.mrb[0].mxu0
      %401 = vmatprep.mubr.f32.mxu0 0.0
      %402 = vmatmul.mubr.f32.gmra.mrb[0].mxu0 %v265
      %v403 = vpop.f32.mrb[0].mxu0
      %v404 = vadd.f32 %v295, %v403
      %v405 = vpop.f32.mrb[0].mxu0
      %406 = vmatprep.mubr.f32.mxu0 0.0
      %407 = vmatmul.mubr.f32.gmra.mrb[0].mxu0 %v266
      %v408 = vpop.f32.mrb[0].mxu0
      %v409 = vadd.f32 %v295, %v408
      %v410 = vpop.f32.mrb[0].mxu0
      %411 = vmatprep.mubr.f32.mxu0 0.0
      %412 = vmatmul.mubr.f32.gmra.mrb[0].mxu0 %v267
      %v413 = vpop.f32.mrb[0].mxu0
      %v414 = vadd.f32 %v295, %v413
      %v415 = vpop.f32.mrb[0].mxu0
      %416 = vmatprep.mubr.f32.mxu0 0.0
      %417 = vmatmul.mubr.f32.gmra.mrb[0].mxu0 %v268
      %v418 = vpop.f32.mrb[0].mxu0
      %v419 = vadd.f32 %v295, %v418
      %v420 = vpop.f32.mrb[0].mxu0
      %421 = vmatprep.mubr.f32.mxu0 0.0
      %422 = vmatmul.mubr.f32.gmra.mrb[0].mxu0 %v269
      %v423 = vpop.f32.mrb[0].mxu0
      %v424 = vadd.f32 %v295, %v423
      %v425 = vpop.f32.mrb[0].mxu0
      %426 = vmatprep.mubr.f32.mxu0 0.0
      %427 = vmatmul.mubr.f32.gmra.mrb[0].mxu0 %v270
      %v428 = vpop.f32.mrb[0].mxu0
      %v429 = vadd.f32 %v295, %v428
      %v430 = vpop.f32.mrb[0].mxu0
      %431 = vmatprep.mubr.f32.mxu0 0.0
      %432 = vmatmul.mubr.f32.gmra.mrb[0].mxu0 %v271
      %v433 = vpop.f32.mrb[0].mxu0
      %v434 = vadd.f32 %v295, %v433
      %v435 = vpop.f32.mrb[0].mxu0
      %436 = vmatprep.mubr.f32.mxu0 0.0
      %437 = vmatmul.mubr.f32.gmra.mrb[0].mxu0 %v272
      %v438 = vpop.f32.mrb[0].mxu0
      %v439 = vadd.f32 %v295, %v438
      %v440 = vpop.f32.mrb[0].mxu0
      %441 = vdwg.mxu0
      %v442 = vtanh.pop %v364
      %v443 = vtanh.pop %v369
      %v444 = vtanh.pop %v374
      %v445 = vtanh.pop %v379
      %v446 = vtanh.pop %v384
      %v447 = vtanh.pop %v389
      %v448 = vtanh.pop %v394
      %v449 = vtanh.pop %v399
      %v450 = vtanh.pop %v404
      %v451 = vtanh.pop %v409
      %v452 = vtanh.pop %v414
      %v453 = vtanh.pop %v419
      %v454 = vtanh.pop %v424
      %v455 = vtanh.pop %v429
      %v456 = vtanh.pop %v434
      %v457 = vtanh.pop %v439
      %v458 = vld [vmem:[#allocation2] sm:$0x1]
      %459 = vmatprep.subr.mxu0 0.0
      %460 = vmatpush1.msra.mxu0 %v442
      %461 = vmatprep.subr.mxu0 0.0
      %462 = vmatpush1.msra.mxu0 %v443
      %463 = vmatprep.subr.mxu0 0.0
      %464 = vmatpush1.msra.mxu0 %v444
      %465 = vmatprep.subr.mxu0 0.0
      %466 = vmatpush1.msra.mxu0 %v445
      %467 = vmatprep.subr.mxu0 0.0
      %468 = vmatpush1.msra.mxu0 %v446
      %469 = vmatprep.subr.mxu0 0.0
      %470 = vmatpush1.msra.mxu0 %v447
      %471 = vmatprep.subr.mxu0 0.0
      %472 = vmatpush1.msra.mxu0 %v448
      %473 = vmatprep.subr.mxu0 0.0
      %474 = vmatpush1.msra.mxu0 %v449
      %475 = vmatprep.subr.mxu0 0.0
      %476 = vmatpush1.msra.mxu0 %v450
      %477 = vmatprep.subr.mxu0 0.0
      %478 = vmatpush1.msra.mxu0 %v451
      %479 = vmatprep.subr.mxu0 0.0
      %480 = vmatpush1.msra.mxu0 %v452
      %481 = vmatprep.subr.mxu0 0.0
      %482 = vmatpush1.msra.mxu0 %v453
      %483 = vmatprep.subr.mxu0 0.0
      %484 = vmatpush1.msra.mxu0 %v454
      %485 = vmatprep.subr.mxu0 0.0
      %486 = vmatpush1.msra.mxu0 %v455
      %487 = vmatprep.subr.mxu0 0.0
      %488 = vmatpush1.msra.mxu0 %v456
      %489 = vmatprep.subr.mxu0 0.0
      %490 = vmatpush1.msra.mxu0 %v457
      %491 = vmatprep.subr.mxu0 0.0
      %492 = vmatpush1.msra.mxu0 0.0
      %493 = vmatprep.subr.mxu0 0.0
      %494 = vmatpush1.msra.mxu0 0.0
      %495 = vmatprep.subr.mxu0 0.0
      %496 = vmatpush1.msra.mxu0 0.0
      %497 = vmatprep.subr.mxu0 0.0
      %498 = vmatpush1.msra.mxu0 0.0
      %499 = vmatprep.subr.mxu0 0.0
      %500 = vmatpush1.msra.mxu0 0.0
      %501 = vmatprep.subr.mxu0 0.0
      %502 = vmatpush1.msra.mxu0 0.0
      %503 = vmatprep.subr.mxu0 0.0
      %504 = vmatpush1.msra.mxu0 0.0
      %505 = vmatprep.subr.mxu0 0.0
      %506 = vmatpush1.msra.mxu0 0.0
      %507 = vmatprep.subr.mxu0 0.0
      %508 = vmatpush1.msra.mxu0 0.0
      %509 = vmatprep.subr.mxu0 0.0
      %510 = vmatpush1.msra.mxu0 0.0
      %511 = vmatprep.subr.mxu0 0.0
      %512 = vmatpush1.msra.mxu0 0.0
      %513 = vmatprep.subr.mxu0 0.0
      %514 = vmatpush1.msra.mxu0 0.0
      %515 = vmatprep.subr.mxu0 0.0
      %516 = vmatpush1.msra.mxu0 0.0
      %517 = vmatprep.subr.mxu0 0.0
      %518 = vmatpush1.msra.mxu0 0.0
      %519 = vmatprep.subr.mxu0 0.0
      %520 = vmatpush1.msra.mxu0 0.0
      %521 = vmatprep.subr.mxu0 0.0
      %522 = vmatpush1.msra.mxu0 0.0
      %523 = vmatprep.mubr.f32.mxu0 0.0
      %524 = vmatmul.mubr.f32.gmra.mrb[0].mxu0 %v273
      %v525 = vpop.f32.mrb[0].mxu0
      %v526 = vadd.f32 0.0, %v525
      %v527 = vpop.f32.mrb[0].mxu0
      %528 = vdwg.mxu0
      %v529 = vadd.f32 %v458, %v526
      %530 = vst [vmem:[#allocation2] sm:$0x1] %v529
      %v531 = vld [vmem:[#allocation3] sm:$0x1]
      %vm532 = vcmask 1040384
      %v533 = vsel %vm532, %v273, 0.0
      %534 = vadd.xlane.f32.xlu0 %v533
      %v535 = vpop.xlane.xlu0 %534
      %v536 = vadd.f32 %v531, %v535
      %vm537 = vcmask 0
      %538 = vst.msk [vmem:[#allocation3] sm:$0x1] %vm537, %v536
      %p539 = scmp.eq.s32.totalorder %s20, 1
      // Predicated region
      $region41: #{similarity_estimator_forward_impl.2} parent=35 // pred_check
        %p540 = pneg %p539
      $region42: #{similarity_estimator_forward_impl.2} parent=35 // pred_check_branch
        %542 = sbr.rel (%p540) target = $region44
      $region43: #{similarity_estimator_forward_impl.2} parent=35 // pred_region
        %v543 = vld [vmem:[#allocation2] sm:$0x1]
        %v544 = vld [vmem:[#allocation3] sm:$0x1]
        %v545 = vrcp.pop %v544
        %547 = vset.pattern.permute.xlu0 0
        %548 = vperm.xlu0 %547, %v545
        %v549 = vpop.permute.xlu0 %548
        %v551 = vlaneseq
        %v552 = vshrl.u32 %v551, 7
        %v553 = vsub.s32 0, %v552
        %v554 = vrot.slane %v549, %v553
        %v555 = vmul.f32 %v543, %v554
        %556 = vst [vmem:[%s249] sm:$0x1] %v555
      $region44: #{similarity_estimator_forward_impl.2} parent=35 // pred_fallthru
        _
      %p557 = scmp.lt.s32.totalorder %s19, 15
      %s558 = scalar_select %p557, %s19, 15
      %s559 = scalar_lea.vmem %s4, %s558
      // Predicated region
      $region45: #{similarity_estimator_forward_impl.2} parent=35 // pred_check
        %p560 = pneg %p143
      $region46: #{similarity_estimator_forward_impl.2} parent=35 // pred_check_branch
        %562 = sbr.rel (%p560) target = $region48
      $region47: #{similarity_estimator_forward_impl.2} parent=35 // pred_region
        _
      $region48: #{similarity_estimator_forward_impl.2} parent=35 // pred_fallthru
        _
    $region36: #{similarity_estimator_forward_impl.2} parent=5 // pred_fallthru
      _
    %p563 = scmp.le.s32.totalorder 2, %s10
    // Predicated region
    $region49: #{similarity_estimator_forward_impl.2} parent=5 // pred_check
      %p564 = pneg %p563
    $region50: #{similarity_estimator_forward_impl.2} parent=5 // pred_check_branch
      %566 = sbr.rel (%p564) target = $region52
    $region51: #{similarity_estimator_forward_impl.2} parent=5 // pred_region
      %s567 = ssub.s32 %s10, 2
      // Predicated region
      $region53: #{similarity_estimator_forward_impl.2} parent=51 // pred_check
        %p568 = pneg %p149
      $region54: #{similarity_estimator_forward_impl.2} parent=51 // pred_check_branch
        %570 = sbr.rel (%p568) target = $region56
      $region55: #{similarity_estimator_forward_impl.2} parent=51 // pred_region
        %p571 = scmp.lt.s32.totalorder %s21, 15
        %s572 = scalar_select %p571, %s21, 15
        %s573 = scalar_lea.vmem %s4, %s572
      $region56: #{similarity_estimator_forward_impl.2} parent=51 // pred_fallthru
        _
    $region52: #{similarity_estimator_forward_impl.2} parent=5 // pred_fallthru
      _
  $region6: #{similarity_estimator_forward_impl.2} parent=0 // loop_footer
    %s14 = sadd.s32 1, %s10
  $region7: #{similarity_estimator_forward_impl.2} parent=0 // loop_footer_branch
    %9 = sbr.rel target = $region3
  $region8: #{similarity_estimator_forward_impl.2} parent=0 // loop_exit
    _

</llo_original>
